<compile_context>
chip_gen: v6e
topology: v6e:2x2x1
jax: 0.10.0
libtpu: 0.0.40
codegen_flags: <defaults>
</compile_context>

<pallas_src>
import functools

import jax
import jax.numpy as jnp
from jax.experimental import pallas as pl
from jax.experimental.pallas import tpu as pltpu

_LANES = 128
_SUBLANES = 8
_EPS = 1e-13  # matches the reference PyTorch module


def _landmarks_loss_kernel(pred_ref, true_ref, out_ref, loss_acc, mask_acc,
                           *, chunk, num_chunks, tile_rows, valid_rows):
    """Grid axis 0 is a reduction over row tiles ("arbitrary").

    chunk/num_chunks/tile_rows are static Python ints; valid_rows is a static
    int when the last grid block reads past the array (tail masking needed)
    and None otherwise.
    """
    i = pl.program_id(0)

    @pl.when(i == 0)
    def _init():
        loss_acc[...] = jnp.zeros_like(loss_acc)
        mask_acc[...] = jnp.zeros_like(mask_acc)

    groups = chunk // _SUBLANES

    def body(g, carry):
        start = pl.multiple_of(g * chunk, chunk)
        p = pred_ref[pl.ds(start, chunk), :].astype(jnp.float32)
        t = true_ref[pl.ds(start, chunk), :].astype(jnp.float32)

        pos = t > 0.0
        if valid_rows is not None:
            # Tail block: rows >= valid_rows are out-of-bounds garbage.
            row_ids = jax.lax.broadcasted_iota(jnp.int32, (chunk, _LANES), 0)
            row_ids = row_ids + (i * tile_rows + start)
            pos = jnp.logical_and(pos, row_ids < valid_rows)

        d = jnp.where(pos, jnp.abs(p - t), 0.0)     # |pred*mask - true*mask|
        c = jnp.minimum(d, 1.0)
        per_elem = c * (d - 0.5 * c)                # SmoothL1, beta=1.0
        cnt = jnp.where(pos, 1.0, 0.0)

        # Fold (chunk, 128) -> (8, 128): vreg-aligned reshape + VPU adds only.
        loss_acc[...] += jnp.sum(per_elem.reshape(groups, _SUBLANES, _LANES),
                                 axis=0)
        mask_acc[...] += jnp.sum(cnt.reshape(groups, _SUBLANES, _LANES),
                                 axis=0)
        return carry

    if num_chunks == 1:
        body(0, 0)
    else:
        unroll = num_chunks if num_chunks <= 4 else 4
        jax.lax.fori_loop(0, num_chunks, body, 0, unroll=unroll)

    @pl.when(i == pl.num_programs(0) - 1)
    def _finalize():
        # Single cross-lane (XLU) reduction + divide, exactly once.
        loss_sum = jnp.sum(loss_acc[...])
        mask_sum = jnp.sum(mask_acc[...])
        out_ref[0, 0] = loss_sum / (mask_sum + _EPS)


def landmarks_loss(pred, truel, alpha=1.0, tile_rows=2048):
    """SmoothL1Loss(pred*mask, truel*mask, reduction='sum') / (sum(mask)+1e-13)
    with mask = truel > 0.

    `alpha` is accepted for API parity with the PyTorch module but is unused
    in its forward pass.  On v7x consider tile_rows=4096.
    """
    assert pred.shape == truel.shape
    total = pred.size

    # Lane-dense layout: flatten -> (rows, 128) with rows a multiple of 8.
    # Pad only to a multiple of 8*128 (not to a tile multiple), and skip the
    # pad entirely when already aligned.
    padded_total = pl.cdiv(total, _LANES * _SUBLANES) * (_LANES * _SUBLANES)
    pad = padded_total - total
    rows = padded_total // _LANES  # multiple of 8

    p = pred.reshape(-1)
    t = truel.reshape(-1)
    if pad:
        p = jnp.pad(p, (0, pad))
        t = jnp.pad(t, (0, pad))
    p = p.reshape(rows, _LANES)
    t = t.reshape(rows, _LANES)

    # Tile / chunk sizing (all static).
    tile_rows = min(int(tile_rows), rows)
    tile_rows = max(_SUBLANES, (tile_rows // _SUBLANES) * _SUBLANES)
    chunk = min(64, tile_rows)                 # bounds vreg pressure
    tile_rows = (tile_rows // chunk) * chunk   # tile is a whole number of chunks
    num_chunks = tile_rows // chunk

    n_tiles = pl.cdiv(rows, tile_rows)
    # Does the last block read past the array?  (Pallas does not zero-fill.)
    valid_rows = rows if n_tiles * tile_rows != rows else None

    n_elems = rows * _LANES
    bytes_per_elem = p.dtype.itemsize + t.dtype.itemsize

    kernel = functools.partial(
        _landmarks_loss_kernel,
        chunk=chunk,
        num_chunks=num_chunks,
        tile_rows=tile_rows,
        valid_rows=valid_rows,
    )

    out = pl.pallas_call(
        kernel,
        out_shape=jax.ShapeDtypeStruct((1, 1), jnp.float32),
        grid=(n_tiles,),
        in_specs=[
            pl.BlockSpec((tile_rows, _LANES), lambda i: (i, 0)),
            pl.BlockSpec((tile_rows, _LANES), lambda i: (i, 0)),
        ],
        out_specs=pl.BlockSpec(memory_space=pltpu.SMEM),
        scratch_shapes=[
            pltpu.VMEM((_SUBLANES, _LANES), jnp.float32),
            pltpu.VMEM((_SUBLANES, _LANES), jnp.float32),
        ],
        compiler_params=pltpu.CompilerParams(
            dimension_semantics=("arbitrary",),
            allow_input_fusion=[True, True],
        ),
        cost_estimate=pl.CostEstimate(
            flops=10 * n_elems,
            transcendentals=0,
            bytes_accessed=bytes_per_elem * n_elems + 4,
        ),
    )(p, t)
    return out[0, 0]


def _landmarks_loss_ref(pred, truel):
    mask = (truel > 0.0).astype(jnp.float32)
    x = pred.astype(jnp.float32) * mask
    y = truel.astype(jnp.float32) * mask
    d = jnp.abs(x - y)
    per_elem = jnp.where(d < 1.0, 0.5 * d * d, d - 0.5)
    return jnp.sum(per_elem) / (jnp.sum(mask) + _EPS)


if __name__ == "__main__":
    key = jax.random.PRNGKey(0)
    kp, kt, kp2, kt2 = jax.random.split(key, 4)

    # Small landmark-like shape: 8 boxes x 10 landmark coords (5 (x,y) points).
    N, L = 8, 10
    pred = jax.random.normal(kp, (N, L), dtype=jnp.float32) * 2.0
    truel = jax.random.normal(kt, (N, L), dtype=jnp.float32)  # ~half are <= 0

    loss = landmarks_loss(pred, truel)
    jax.block_until_ready(loss)
    ref = _landmarks_loss_ref(pred, truel)
    if not jnp.allclose(loss, ref, rtol=1e-5, atol=1e-5):
        raise AssertionError(f"mismatch (small): kernel={loss}, ref={ref}")

    # Larger case with a forced odd tile so the multi-tile grid path
    # (init / accumulate / finalize) AND the in-kernel tail-row masking for a
    # non-tile-multiple array are both exercised.
    N2, L2 = 409, 10      # 4090 elems -> 32 rows of 128; tile_rows=24 -> 2 tiles
    pred2 = jax.random.normal(kp2, (N2, L2), dtype=jnp.float32) * 2.0
    truel2 = jax.random.normal(kt2, (N2, L2), dtype=jnp.float32)

    loss2 = landmarks_loss(pred2, truel2, tile_rows=24)
    jax.block_until_ready(loss2)
    ref2 = _landmarks_loss_ref(pred2, truel2)
    if not jnp.allclose(loss2, ref2, rtol=1e-5, atol=1e-5):
        raise AssertionError(f"mismatch (tiled): kernel={loss2}, ref={ref2}")

    print("KERNEL_OK")
</pallas_src>

<mosaic_0001>
module attributes {stable_mosaic.version = 11 : i64} {
  func.func @_landmarks_loss_kernel(%arg0: i32, %arg1: memref<8x128xf32, #tpu.memory_space<vmem>>, %arg2: memref<8x128xf32, #tpu.memory_space<vmem>>, %arg3: memref<1x1xf32, #tpu.memory_space<smem>>, %arg4: memref<8x128xf32, #tpu.memory_space<vmem>>, %arg5: memref<8x128xf32, #tpu.memory_space<vmem>>) attributes {dimension_semantics = [#tpu.dimension_semantics<arbitrary>], iteration_bounds = array<i64: 1>, scalar_prefetch = 0 : i64, scratch_operands = 2 : i64, tpu.core_type = #tpu.core_type<tc>, window_params = [{transform_indices = @transform_0, window_bounds = array<i64: 8, 128>}, {transform_indices = @transform_1, window_bounds = array<i64: 8, 128>}, {transform_indices = @transform_2, window_bounds = array<i64: 1, 1>}]} {
    %c0_i32 = arith.constant 0 : i32
    %0 = arith.cmpi eq, %arg0, %c0_i32 : i32
    %1 = arith.extui %0 : i1 to i32
    %c0_i32_0 = arith.constant 0 : i32
    %2 = arith.cmpi ne, %1, %c0_i32_0 : i32
    scf.if %2 {
      %cst_20 = arith.constant 0.000000e+00 : f32
      %36 = vector.broadcast %cst_20 : f32 to vector<8x128xf32>
      %c0_21 = arith.constant 0 : index
      %c0_22 = arith.constant 0 : index
      %37 = vector.load %arg4[%c0_21, %c0_22] : memref<8x128xf32, #tpu.memory_space<vmem>>, vector<8x128xf32>
      tpu.vector_store %arg4[%c0_21, %c0_22], %36 {strides = array<i32>} : memref<8x128xf32, #tpu.memory_space<vmem>>, vector<8x128xf32>,
      %cst_23 = arith.constant 0.000000e+00 : f32
      %38 = vector.broadcast %cst_23 : f32 to vector<8x128xf32>
      %c0_24 = arith.constant 0 : index
      %c0_25 = arith.constant 0 : index
      %39 = vector.load %arg5[%c0_24, %c0_25] : memref<8x128xf32, #tpu.memory_space<vmem>>, vector<8x128xf32>
      tpu.vector_store %arg5[%c0_24, %c0_25], %38 {strides = array<i32>} : memref<8x128xf32, #tpu.memory_space<vmem>>, vector<8x128xf32>,
    } else {
    }
    %c0_i32_1 = arith.constant 0 : i32
    %3 = tpu.assume_multiple %c0_i32_1, 8 : i32
    %4 = arith.index_cast %3 : i32 to index
    %c0 = arith.constant 0 : index
    %5 = vector.load %arg1[%4, %c0] : memref<8x128xf32, #tpu.memory_space<vmem>>, vector<8x128xf32>
    %6 = arith.index_cast %3 : i32 to index
    %c0_2 = arith.constant 0 : index
    %7 = vector.load %arg2[%6, %c0_2] : memref<8x128xf32, #tpu.memory_space<vmem>>, vector<8x128xf32>
    %cst = arith.constant 0.000000e+00 : f32
    %8 = vector.broadcast %cst : f32 to vector<8x128xf32>
    %9 = arith.cmpf ogt, %7, %8 : vector<8x128xf32>
    %10 = arith.subf %5, %7 : vector<8x128xf32>
    %11 = math.absf %10 : vector<8x128xf32>
    %cst_3 = arith.constant 0.000000e+00 : f32
    %12 = vector.broadcast %cst_3 : f32 to vector<8x128xf32>
    %13 = arith.select %9, %11, %12 : vector<8x128xi1>, vector<8x128xf32>
    %cst_4 = arith.constant 1.000000e+00 : f32
    %14 = vector.broadcast %cst_4 : f32 to vector<8x128xf32>
    %15 = arith.minimumf %13, %14 : vector<8x128xf32>
    %cst_5 = arith.constant 5.000000e-01 : f32
    %16 = vector.broadcast %cst_5 : f32 to vector<8x128xf32>
    %17 = arith.mulf %16, %15 : vector<8x128xf32>
    %18 = arith.subf %13, %17 : vector<8x128xf32>
    %19 = arith.mulf %15, %18 : vector<8x128xf32>
    %cst_6 = arith.constant 1.000000e+00 : f32
    %cst_7 = arith.constant 0.000000e+00 : f32
    %20 = vector.broadcast %cst_6 : f32 to vector<8x128xf32>
    %21 = vector.broadcast %cst_7 : f32 to vector<8x128xf32>
    %22 = arith.select %9, %20, %21 : vector<8x128xi1>, vector<8x128xf32>
    %c0_8 = arith.constant 0 : index
    %c0_9 = arith.constant 0 : index
    %23 = vector.load %arg4[%c0_8, %c0_9] : memref<8x128xf32, #tpu.memory_space<vmem>>, vector<8x128xf32>
    %24 = vector.shape_cast %19 : vector<8x128xf32> to vector<1x8x128xf32>
    %cst_10 = arith.constant dense<0.000000e+00> : vector<8x128xf32>
    %25 = vector.multi_reduction <add>, %24, %cst_10 [0] : vector<1x8x128xf32> to vector<8x128xf32>
    %26 = arith.addf %23, %25 : vector<8x128xf32>
    %c0_11 = arith.constant 0 : index
    %c0_12 = arith.constant 0 : index
    %27 = vector.load %arg4[%c0_11, %c0_12] : memref<8x128xf32, #tpu.memory_space<vmem>>, vector<8x128xf32>
    tpu.vector_store %arg4[%c0_11, %c0_12], %26 {strides = array<i32>} : memref<8x128xf32, #tpu.memory_space<vmem>>, vector<8x128xf32>,
    %c0_13 = arith.constant 0 : index
    %c0_14 = arith.constant 0 : index
    %28 = vector.load %arg5[%c0_13, %c0_14] : memref<8x128xf32, #tpu.memory_space<vmem>>, vector<8x128xf32>
    %29 = vector.shape_cast %22 : vector<8x128xf32> to vector<1x8x128xf32>
    %cst_15 = arith.constant dense<0.000000e+00> : vector<8x128xf32>
    %30 = vector.multi_reduction <add>, %29, %cst_15 [0] : vector<1x8x128xf32> to vector<8x128xf32>
    %31 = arith.addf %28, %30 : vector<8x128xf32>
    %c0_16 = arith.constant 0 : index
    %c0_17 = arith.constant 0 : index
    %32 = vector.load %arg5[%c0_16, %c0_17] : memref<8x128xf32, #tpu.memory_space<vmem>>, vector<8x128xf32>
    tpu.vector_store %arg5[%c0_16, %c0_17], %31 {strides = array<i32>} : memref<8x128xf32, #tpu.memory_space<vmem>>, vector<8x128xf32>,
    %c0_i32_18 = arith.constant 0 : i32
    %33 = arith.cmpi eq, %arg0, %c0_i32_18 : i32
    %34 = arith.extui %33 : i1 to i32
    %c0_i32_19 = arith.constant 0 : i32
    %35 = arith.cmpi ne, %34, %c0_i32_19 : i32
    scf.if %35 {
      %c0_20 = arith.constant 0 : index
      %c0_21 = arith.constant 0 : index
      %36 = vector.load %arg4[%c0_20, %c0_21] : memref<8x128xf32, #tpu.memory_space<vmem>>, vector<8x128xf32>
      %37 = vector.shape_cast %36 : vector<8x128xf32> to vector<1x8x128xf32>
      %cst_22 = arith.constant dense<0.000000e+00> : vector<1xf32>
      %38 = vector.multi_reduction <add>, %37, %cst_22 [1, 2] : vector<1x8x128xf32> to vector<1xf32>
      %39 = vector.shape_cast %38 : vector<1xf32> to vector<1x1x1xf32>
      %40 = vector.extract %39[0, 0, 0] : f32 from vector<1x1x1xf32>
      %c0_23 = arith.constant 0 : index
      %c0_24 = arith.constant 0 : index
      %41 = vector.load %arg5[%c0_23, %c0_24] : memref<8x128xf32, #tpu.memory_space<vmem>>, vector<8x128xf32>
      %42 = vector.shape_cast %41 : vector<8x128xf32> to vector<1x8x128xf32>
      %cst_25 = arith.constant dense<0.000000e+00> : vector<1xf32>
      %43 = vector.multi_reduction <add>, %42, %cst_25 [1, 2] : vector<1x8x128xf32> to vector<1xf32>
      %44 = vector.shape_cast %43 : vector<1xf32> to vector<1x1x1xf32>
      %45 = vector.extract %44[0, 0, 0] : f32 from vector<1x1x1xf32>
      %cst_26 = arith.constant 9.99999982E-14 : f32
      %46 = arith.addf %45, %cst_26 : f32
      %47 = arith.divf %40, %46 : f32
      %c0_27 = arith.constant 0 : index
      %c0_28 = arith.constant 0 : index
      %48 = memref.load %arg3[%c0_27, %c0_28] : memref<1x1xf32, #tpu.memory_space<smem>>
      memref.store %47, %arg3[%c0_27, %c0_28] : memref<1x1xf32, #tpu.memory_space<smem>>
    } else {
    }
    return
  }
  func.func @transform_0(%arg0: i32) -> (i32, i32) {
    %c0_i32 = arith.constant 0 : i32
    %c0_i32_0 = arith.constant 0 : i32
    return %arg0, %c0_i32 : i32, i32
  }
  func.func @transform_1(%arg0: i32) -> (i32, i32) {
    %c0_i32 = arith.constant 0 : i32
    %c0_i32_0 = arith.constant 0 : i32
    return %arg0, %c0_i32 : i32, i32
  }
  func.func @transform_2(%arg0: i32) -> (i32, i32) {
    %c0_i32 = arith.constant 0 : i32
    %c0_i32_0 = arith.constant 0 : i32
    %c0_i32_1 = arith.constant 0 : i32
    return %c0_i32, %c0_i32_0 : i32, i32
  }
}

</mosaic_0001>

<llo_original>
// kernel: tpu_custom_call.1
$region0: #{tpu_custom_call.1}
  #allocation0 [shape = 'u32[]', space=smem, size = 0x4, offset = 0x4, fixed_abs, tag = 'smem constant byte address 0x4 - core index']
  #allocation1 [shape = 'u32[144,128]{1,0:T(1,128)}', space=vmem, size = 0x12000, scoped, tag = 'internal scratch']
  #allocation2 [shape = 'f32[8,128]{1,0:T(8,128)}', space=vmem, size = 0x1000, scoped, tag = 'scratch operand']
  #allocation3 [shape = 'f32[8,128]{1,0:T(8,128)}', space=vmem, size = 0x1000, scoped, tag = 'scratch operand']
  %s0 = inlined_call_operand.hbm [shape: f32[8,128], index: 0, kind: input, shape index: {}]
  %s1 = inlined_call_operand.hbm [shape: f32[8,128], index: 1, kind: input, shape index: {}]
  %s2 = inlined_call_operand.hbm [shape: f32[1,1], index: 2, kind: output, shape index: {}]
  %s3 = sld [smem:[#allocation0]]
  $region34: #{tpu_custom_call.1} parent=0
    _
  %s5 = ssub.s32 1, %s3
  %s6 = scalar_select 0, %s5, %s3
  $region1: #{tpu_custom_call.1} parent=0
    #allocation4 [shape = 'u8[4096]{0}', space=vmem, size = 0x1000, scoped, tag = 'input window, operand 0, single buffered']
    #allocation5 [shape = 's32[1]{0}', space=sflag, size = 0x4, scoped, tag = 'scoped memory for tpu_custom_call.1']
    #allocation6 [shape = 's32[1]{0}', space=sflag, size = 0x4, scoped, tag = 'scoped memory for tpu_custom_call.1']
    #allocation7 [shape = 'u8[4096]{0}', space=vmem, size = 0x1000, scoped, tag = 'input window, operand 1, single buffered']
    #allocation8 [shape = 's32[1]{0}', space=sflag, size = 0x4, scoped, tag = 'scoped memory for tpu_custom_call.1']
    #allocation9 [shape = 'u8[512]{0}', space=smem, size = 0x200, scoped, tag = 'output window, operand 0, single buffered']
    %7 = vsyncpa [#allocation5], 0
    %8 = vsyncpa [#allocation8], 0
    %9 = vsyncpa [#allocation6], 0
    // Predicated region
    $region2: #{tpu_custom_call.1} parent=1 // pred_check
      _
    $region3: #{tpu_custom_call.1} parent=1 // pred_check_branch
      %11 = sbr.rel (0) target = $region5
    $region4: #{tpu_custom_call.1} parent=1 // pred_region
      %s13 = ssub.s32 128, 128
      %14 = vsyncadd [#allocation5], %s13
      %s16 = sshll.u32 [#allocation4], 4
      %s17 = int_to_ptr.vmem [resolvable:$true] %s16
      %19 = dma.hbm_to_vmem [thread:$0]  %s0, 128, %s17, [#allocation5]
    $region5: #{tpu_custom_call.1} parent=1 // pred_fallthru
      _
    // Predicated region
    $region6: #{tpu_custom_call.1} parent=1 // pred_check
      _
    $region7: #{tpu_custom_call.1} parent=1 // pred_check_branch
      %21 = sbr.rel (0) target = $region9
    $region8: #{tpu_custom_call.1} parent=1 // pred_region
      %s23 = ssub.s32 128, 128
      %24 = vsyncadd [#allocation8], %s23
      %s26 = sshll.u32 [#allocation7], 4
      %s27 = int_to_ptr.vmem [resolvable:$true] %s26
      %29 = dma.hbm_to_vmem [thread:$0]  %s1, 128, %s27, [#allocation8]
    $region9: #{tpu_custom_call.1} parent=1 // pred_fallthru
      _
    // Predicated region
    $region10: #{tpu_custom_call.1} parent=1 // pred_check
      _
    $region11: #{tpu_custom_call.1} parent=1 // pred_check_branch
      %31 = sbr.rel (0) target = $region13
    $region12: #{tpu_custom_call.1} parent=1 // pred_region
      %32 = dma.done [#allocation5], 128
    $region13: #{tpu_custom_call.1} parent=1 // pred_fallthru
      _
    // Predicated region
    $region14: #{tpu_custom_call.1} parent=1 // pred_check
      _
    $region15: #{tpu_custom_call.1} parent=1 // pred_check_branch
      %34 = sbr.rel (0) target = $region17
    $region16: #{tpu_custom_call.1} parent=1 // pred_region
      %35 = dma.done [#allocation8], 128
    $region17: #{tpu_custom_call.1} parent=1 // pred_fallthru
      _
    %p36 = scmp.eq.s32.totalorder 0, 0
    // Predicated region
    $region18: #{tpu_custom_call.1} parent=1 // pred_check
      %p37 = pneg %p36
    $region19: #{tpu_custom_call.1} parent=1 // pred_check_branch
      %39 = sbr.rel (%p37) target = $region21
    $region20: #{tpu_custom_call.1} parent=1 // pred_region
      %40 = vst [vmem:[#allocation2] sm:$0xff] 0.0
      %41 = vst [vmem:[#allocation3] sm:$0xff] 0.0
    $region21: #{tpu_custom_call.1} parent=1 // pred_fallthru
      _
    %v42 = vld [vmem:[#allocation4] sm:$0xff]
    %v43 = vld [vmem:[#allocation7] sm:$0xff]
    %vm44 = vcmp.gt.f32.partialorder %v43, 0.0
    %v45 = vsub.f32 %v42, %v43
    %v46 = vand.u32 2147483647, %v45
    %v47 = vsel %vm44, %v46, 0.0
    %v48 = vmin.f32 %v47, 1.0
    %v49 = vmul.f32 %v48, 0.5
    %v50 = vsub.f32 %v47, %v49
    %v51 = vmul.f32 %v48, %v50
    %v52 = vsel %vm44, 1.0, 0.0
    %v53 = vld [vmem:[#allocation2] sm:$0xff]
    %v54 = vadd.f32 %v51, 0.0
    %v55 = vadd.f32 %v53, %v54
    %56 = vst [vmem:[#allocation2] sm:$0xff] %v55
    %v57 = vld [vmem:[#allocation3] sm:$0xff]
    %v58 = vadd.f32 %v52, 0.0
    %v59 = vadd.f32 %v57, %v58
    %60 = vst [vmem:[#allocation3] sm:$0xff] %v59
    // Predicated region
    $region22: #{tpu_custom_call.1} parent=1 // pred_check
      %p61 = pneg %p36
    $region23: #{tpu_custom_call.1} parent=1 // pred_check_branch
      %63 = sbr.rel (%p61) target = $region25
    $region24: #{tpu_custom_call.1} parent=1 // pred_region
      %v64 = vld [vmem:[#allocation2] sm:$0xff]
      %65 = vadd.xlane.f32.xlu0 %v64
      %v66 = vpop.xlane.xlu0 %65
      %v67 = vrot.slane %v66, 4
      %v68 = vadd.f32 %v66, %v67
      %v69 = vrot.slane %v68, 2
      %v70 = vadd.f32 %v68, %v69
      %v71 = vrot.slane %v70, 1
      %v72 = vadd.f32 %v70, %v71
      %s73 = vtos %v72
      %v74 = vld [vmem:[#allocation3] sm:$0xff]
      %75 = vadd.xlane.f32.xlu0 %v74
      %v76 = vpop.xlane.xlu0 %75
      %v77 = vrot.slane %v76, 4
      %v78 = vadd.f32 %v76, %v77
      %v79 = vrot.slane %v78, 2
      %v80 = vadd.f32 %v78, %v79
      %v81 = vrot.slane %v80, 1
      %v82 = vadd.f32 %v80, %v81
      %s83 = vtos %v82
      %s84 = sadd.f32 %s83, 1e-13
      %v85 = vstv %s84
      %v86 = vrcp.pop %v85
      %s87 = vtos %v86
      %s88 = smul.f32 %s73, %s87
      %s89 = scalar_lea.smem [#allocation9], 0
      %90 = sst [smem:[%s89]] %s88
    $region25: #{tpu_custom_call.1} parent=1 // pred_fallthru
      _
    // Predicated region
    $region26: #{tpu_custom_call.1} parent=1 // pred_check
      _
    $region27: #{tpu_custom_call.1} parent=1 // pred_check_branch
      %92 = sbr.rel (0) target = $region29
    $region28: #{tpu_custom_call.1} parent=1 // pred_region
      %s94 = ssub.s32 16, 16
      %95 = vsyncadd [#allocation6], %s94
      %98 = dma.smem_to_hbm [#allocation9], 16, %s2, [#allocation6]
    $region29: #{tpu_custom_call.1} parent=1 // pred_fallthru
      _
    // Predicated region
    $region30: #{tpu_custom_call.1} parent=1 // pred_check
      _
    $region31: #{tpu_custom_call.1} parent=1 // pred_check_branch
      %100 = sbr.rel (0) target = $region33
    $region32: #{tpu_custom_call.1} parent=1 // pred_region
      %101 = dma.done [#allocation6], 16
    $region33: #{tpu_custom_call.1} parent=1 // pred_fallthru
      _
    %102 = sfence
    %103 = vsyncpa [#allocation5], 1
    %104 = vsyncpa [#allocation8], 1
    %105 = vsyncpa [#allocation6], 1

</llo_original>
